<compile_context>
chip_gen: v7x
topology: tpu7x:2x2x1
jax: 0.10.0
libtpu: 0.0.40
codegen_flags: <defaults>
</compile_context>

<pallas_src>
import functools

import jax
import jax.numpy as jnp
from jax.experimental import pallas as pl
from jax.experimental.pallas import tpu as pltpu


def _round_up(x, m):
    return (x + m - 1) // m * m


def _pick_batches_per_step(n, p_valid, lanes_target=512):
    """Batches folded into one grid step.

    Smallest divisor of n whose step reaches `lanes_target` valid lanes,
    capped so at least 2 grid steps remain (keeps both v7x TensorCores busy);
    otherwise the largest divisor <= n // 2.
    """
    if n <= 1:
        return 1
    best = 1
    for nb in range(1, n // 2 + 1):
        if n % nb == 0:
            best = nb
            if nb * p_valid >= lanes_target:
                break
    return best


def _conv_fused_gemm_kernel(x_ref, w_ref, bias_ref, o_ref, patch_ref, *,
                            offsets, c_in, p_pad, nb, k_valid):
    """NB batch elements per step: one implicit-im2col build + one fused GEMM.

    x_ref:     (NB, C_in, L_flat)      bf16  flattened zero-padded inputs
    w_ref:     (C_out_pad, K_pad)      bf16  K = C_in*KH*KW (zero-padded cols)
    bias_ref:  (C_out_pad, 1)          f32
    o_ref:     (NB, C_out_pad, P_pad)  f32   spatial on the lane axis
    patch_ref: (K_pad, NB*P_pad)       bf16  VMEM scratch (implicit im2col)
    """
    k_pad = patch_ref.shape[0]

    # Zero the K-padding rows every step: their weight columns are zero, but
    # uninitialized VMEM could hold NaN/Inf (0 * NaN = NaN).  Tiny write and
    # robust under megacore grid sharding (no reliance on step-0 persistence).
    if k_pad > k_valid:
        patch_ref[k_valid:, :] = jnp.zeros(
            (k_pad - k_valid, patch_ref.shape[1]), patch_ref.dtype)

    # Implicit im2col: each (batch, tap) shifted slice is copied exactly once.
    for b in range(nb):                              # NB batches per step
        for k, off in enumerate(offsets):            # KH*KW taps, unrolled
            patch_ref[k * c_in:(k + 1) * c_in, b * p_pad:(b + 1) * p_pad] = (
                x_ref[b, :, off:off + p_pad])

    # One fat GEMM on the MXU: (C_out_pad, K_pad) @ (K_pad, NB*P_pad) -> f32.
    acc = jnp.dot(w_ref[...], patch_ref[...],
                  preferred_element_type=jnp.float32)
    out = acc + bias_ref[...]                        # (C_out_pad,1) lane bcast

    for b in range(nb):                              # aligned (P_pad % 128 == 0)
        o_ref[b] = out[:, b * p_pad:(b + 1) * p_pad].astype(o_ref.dtype)


@functools.partial(jax.jit, static_argnames=("padding", "dilation"))
def conv2d_pallas(x, w, b, *, padding=0, dilation=1):
    """Conv2d forward, stride=1 (as in the module), symmetric padding, dilation, bias.

    x: (N, C_in, H, W) f32   w: (C_out, C_in, KH, KW) f32   b: (C_out,) f32
    returns (N, C_out, H_out, W_out) f32
    """
    N, C_in, H, W = x.shape
    C_out, C_in_w, KH, KW = w.shape
    assert C_in == C_in_w
    p, d = padding, dilation

    H_pad, W_pad = H + 2 * p, W + 2 * p
    H_out = H_pad - d * (KH - 1)
    W_out = W_pad - d * (KW - 1)
    assert H_out > 0 and W_out > 0
    # NOTE: the flat-offset / garbage-column mapping below is only valid for
    # stride=1 (which is what the module hard-codes) and symmetric padding.

    P = H_out * W_pad                  # flat outputs per batch (incl. garbage cols)
    P_pad = _round_up(P, 128)          # lane-dense output block
    off_max = (KH - 1) * d * W_pad + (KW - 1) * d
    L_flat = _round_up(max(H_pad * W_pad, P_pad + off_max), 128)
    C_out_pad = _round_up(C_out, 8)    # TODO(synk): block C_out toward 128/256 MXU-M tiles for large C_out
    K = C_in * KH * KW
    K_pad = _round_up(K, 16)           # bf16 sublane packing
    offsets = tuple(kh * d * W_pad + kw * d
                    for kh in range(KH) for kw in range(KW))

    NB = _pick_batches_per_step(N, P)
    grid = (N // NB,)

    # --- host prep: pad + flatten + bf16 cast (single pass; no 9x im2col) ----
    # TODO(synk): for large activations, pass the unpadded NCHW input with
    # memory_space=pl.ANY and DMA rows + zero the halo in-kernel (or use
    # allow_input_fusion) to avoid this extra HBM pass.
    xp = jnp.pad(x, ((0, 0), (0, 0), (p, p), (p, p)))
    x_flat = xp.reshape(N, C_in, H_pad * W_pad)
    x_flat = jnp.pad(x_flat, ((0, 0), (0, 0), (0, L_flat - H_pad * W_pad)))
    x_flat = x_flat.astype(jnp.bfloat16)

    # weights: (C_out, C_in, KH, KW) -> (C_out_pad, K_pad); column r = k*C_in+c
    # with k = kh*KW + kw, matching the patch-scratch row layout.
    w_big = jnp.transpose(w, (0, 2, 3, 1)).reshape(C_out, K)
    w_big = jnp.pad(w_big, ((0, C_out_pad - C_out),
                            (0, K_pad - K))).astype(jnp.bfloat16)

    bias_col = jnp.pad(b, (0, C_out_pad - C_out)).reshape(
        C_out_pad, 1).astype(jnp.float32)

    kernel = functools.partial(
        _conv_fused_gemm_kernel,
        offsets=offsets, c_in=C_in, p_pad=P_pad, nb=NB, k_valid=K)

    out_flat = pl.pallas_call(
        kernel,
        out_shape=jax.ShapeDtypeStruct((N, C_out_pad, P_pad), jnp.float32),
        grid_spec=pltpu.PrefetchScalarGridSpec(
            num_scalar_prefetch=0,
            grid=grid,
            in_specs=[
                pl.BlockSpec((NB, C_in, L_flat), lambda i: (i, 0, 0)),
                pl.BlockSpec((C_out_pad, K_pad), lambda i: (0, 0)),
                pl.BlockSpec((C_out_pad, 1), lambda i: (0, 0)),
            ],
            out_specs=pl.BlockSpec((NB, C_out_pad, P_pad), lambda i: (i, 0, 0)),
            scratch_shapes=[pltpu.VMEM((K_pad, NB * P_pad), jnp.bfloat16)],
        ),
        compiler_params=pltpu.CompilerParams(
            dimension_semantics=("parallel",)),
    )(x_flat, w_big, bias_col)

    # TODO(synk): at real conv sizes, add a spatial row-tile grid axis with a
    # (KH-1)*d halo and set vmem_limit_bytes explicitly (v7x VMEM is 64 MiB).
    out = out_flat[:, :C_out, :P].reshape(
        N, C_out, H_out, W_pad)[:, :, :, :W_out]
    return out


if __name__ == "__main__":
    # Module config: Conv(in_channels=4, out_channels=8, kernel=3, padding=1)
    in_channels, out_channels, kernel_size, padding, dilation = 4, 8, 3, 1, 1
    N, H, W = 2, 16, 16

    key = jax.random.PRNGKey(0)
    kx, kw_, kb = jax.random.split(key, 3)
    x = jax.random.normal(kx, (N, in_channels, H, W), dtype=jnp.float32)
    fan_in = in_channels * kernel_size * kernel_size
    w = jax.random.normal(
        kw_, (out_channels, in_channels, kernel_size, kernel_size),
        dtype=jnp.float32) / jnp.sqrt(fan_in)
    b = jax.random.normal(kb, (out_channels,), dtype=jnp.float32) * 0.1

    out = conv2d_pallas(x, w, b, padding=padding, dilation=dilation)
    out = jax.block_until_ready(out)

    # Reference on the same bf16-rounded operands (the kernel deliberately
    # computes bf16 x bf16 -> f32 accumulation, a documented precision choice);
    # bf16*bf16 products are exact in f32, so only accumulation order differs.
    xr = x.astype(jnp.bfloat16).astype(jnp.float32)
    wr = w.astype(jnp.bfloat16).astype(jnp.float32)
    ref = jax.lax.conv_general_dilated(
        xr, wr, window_strides=(1, 1),
        padding=[(padding, padding), (padding, padding)],
        rhs_dilation=(dilation, dilation),
        dimension_numbers=("NCHW", "OIHW", "NCHW"),
        precision=jax.lax.Precision.HIGHEST,
    ) + b.reshape(1, -1, 1, 1)

    assert out.shape == (N, out_channels, H, W), out.shape
    assert jnp.allclose(out, ref, atol=2e-3, rtol=2e-3), float(
        jnp.max(jnp.abs(out - ref)))

    print("KERNEL_OK")
</pallas_src>

<mosaic_0001>
module attributes {stable_mosaic.version = 11 : i64} {
  func.func @_conv_fused_gemm_kernel(%arg0: i32, %arg1: memref<1x4x512xbf16, #tpu.memory_space<vmem>>, %arg2: memref<8x48xbf16, #tpu.memory_space<vmem>>, %arg3: memref<8x1xf32, #tpu.memory_space<vmem>>, %arg4: memref<1x8x384xf32, #tpu.memory_space<vmem>>, %arg5: memref<48x384xbf16, #tpu.memory_space<vmem>>) attributes {dimension_semantics = [#tpu.dimension_semantics<parallel>], iteration_bounds = array<i64: 2>, scalar_prefetch = 0 : i64, scratch_operands = 1 : i64, tpu.core_type = #tpu.core_type<tc>, window_params = [{transform_indices = @transform_0, window_bounds = array<i64: 1, 4, 512>}, {pipeline_mode = #tpu.pipeline_mode<synchronous>, transform_indices = @transform_1, window_bounds = array<i64: 8, 48>}, {pipeline_mode = #tpu.pipeline_mode<synchronous>, transform_indices = @transform_2, window_bounds = array<i64: 8, 1>}, {transform_indices = @transform_3, window_bounds = array<i64: 1, 8, 384>}]} {
    %cst = arith.constant 0.000000e+00 : bf16
    %0 = vector.broadcast %cst : bf16 to vector<12x384xbf16>
    %c36 = arith.constant 36 : index
    %c0 = arith.constant 0 : index
    %1 = vector.load %arg5[%c36, %c0] : memref<48x384xbf16, #tpu.memory_space<vmem>>, vector<12x384xbf16>
    tpu.vector_store %arg5[%c36, %c0], %0 {strides = array<i32>} : memref<48x384xbf16, #tpu.memory_space<vmem>>, vector<12x384xbf16>,
    %c0_0 = arith.constant 0 : index
    %c0_1 = arith.constant 0 : index
    %c0_2 = arith.constant 0 : index
    %2 = vector.load %arg1[%c0_0, %c0_1, %c0_2] : memref<1x4x512xbf16, #tpu.memory_space<vmem>>, vector<1x4x384xbf16>
    %3 = vector.shape_cast %2 : vector<1x4x384xbf16> to vector<4x384xbf16>
    %c0_3 = arith.constant 0 : index
    %c0_4 = arith.constant 0 : index
    %4 = vector.load %arg5[%c0_3, %c0_4] : memref<48x384xbf16, #tpu.memory_space<vmem>>, vector<4x384xbf16>
    tpu.vector_store %arg5[%c0_3, %c0_4], %3 {strides = array<i32>} : memref<48x384xbf16, #tpu.memory_space<vmem>>, vector<4x384xbf16>,
    %c0_5 = arith.constant 0 : index
    %c0_6 = arith.constant 0 : index
    %c1 = arith.constant 1 : index
    %5 = vector.load %arg1[%c0_5, %c0_6, %c1] : memref<1x4x512xbf16, #tpu.memory_space<vmem>>, vector<1x4x384xbf16>
    %6 = vector.shape_cast %5 : vector<1x4x384xbf16> to vector<4x384xbf16>
    %c4 = arith.constant 4 : index
    %c0_7 = arith.constant 0 : index
    %7 = vector.load %arg5[%c4, %c0_7] : memref<48x384xbf16, #tpu.memory_space<vmem>>, vector<4x384xbf16>
    tpu.vector_store %arg5[%c4, %c0_7], %6 {strides = array<i32>} : memref<48x384xbf16, #tpu.memory_space<vmem>>, vector<4x384xbf16>,
    %c0_8 = arith.constant 0 : index
    %c0_9 = arith.constant 0 : index
    %c2 = arith.constant 2 : index
    %8 = vector.load %arg1[%c0_8, %c0_9, %c2] : memref<1x4x512xbf16, #tpu.memory_space<vmem>>, vector<1x4x384xbf16>
    %9 = vector.shape_cast %8 : vector<1x4x384xbf16> to vector<4x384xbf16>
    %c8 = arith.constant 8 : index
    %c0_10 = arith.constant 0 : index
    %10 = vector.load %arg5[%c8, %c0_10] : memref<48x384xbf16, #tpu.memory_space<vmem>>, vector<4x384xbf16>
    tpu.vector_store %arg5[%c8, %c0_10], %9 {strides = array<i32>} : memref<48x384xbf16, #tpu.memory_space<vmem>>, vector<4x384xbf16>,
    %c0_11 = arith.constant 0 : index
    %c0_12 = arith.constant 0 : index
    %c18 = arith.constant 18 : index
    %11 = vector.load %arg1[%c0_11, %c0_12, %c18] : memref<1x4x512xbf16, #tpu.memory_space<vmem>>, vector<1x4x384xbf16>
    %12 = vector.shape_cast %11 : vector<1x4x384xbf16> to vector<4x384xbf16>
    %c12 = arith.constant 12 : index
    %c0_13 = arith.constant 0 : index
    %13 = vector.load %arg5[%c12, %c0_13] : memref<48x384xbf16, #tpu.memory_space<vmem>>, vector<4x384xbf16>
    tpu.vector_store %arg5[%c12, %c0_13], %12 {strides = array<i32>} : memref<48x384xbf16, #tpu.memory_space<vmem>>, vector<4x384xbf16>,
    %c0_14 = arith.constant 0 : index
    %c0_15 = arith.constant 0 : index
    %c19 = arith.constant 19 : index
    %14 = vector.load %arg1[%c0_14, %c0_15, %c19] : memref<1x4x512xbf16, #tpu.memory_space<vmem>>, vector<1x4x384xbf16>
    %15 = vector.shape_cast %14 : vector<1x4x384xbf16> to vector<4x384xbf16>
    %c16 = arith.constant 16 : index
    %c0_16 = arith.constant 0 : index
    %16 = vector.load %arg5[%c16, %c0_16] : memref<48x384xbf16, #tpu.memory_space<vmem>>, vector<4x384xbf16>
    tpu.vector_store %arg5[%c16, %c0_16], %15 {strides = array<i32>} : memref<48x384xbf16, #tpu.memory_space<vmem>>, vector<4x384xbf16>,
    %c0_17 = arith.constant 0 : index
    %c0_18 = arith.constant 0 : index
    %c20 = arith.constant 20 : index
    %17 = vector.load %arg1[%c0_17, %c0_18, %c20] : memref<1x4x512xbf16, #tpu.memory_space<vmem>>, vector<1x4x384xbf16>
    %18 = vector.shape_cast %17 : vector<1x4x384xbf16> to vector<4x384xbf16>
    %c20_19 = arith.constant 20 : index
    %c0_20 = arith.constant 0 : index
    %19 = vector.load %arg5[%c20_19, %c0_20] : memref<48x384xbf16, #tpu.memory_space<vmem>>, vector<4x384xbf16>
    tpu.vector_store %arg5[%c20_19, %c0_20], %18 {strides = array<i32>} : memref<48x384xbf16, #tpu.memory_space<vmem>>, vector<4x384xbf16>,
    %c0_21 = arith.constant 0 : index
    %c0_22 = arith.constant 0 : index
    %c36_23 = arith.constant 36 : index
    %20 = vector.load %arg1[%c0_21, %c0_22, %c36_23] : memref<1x4x512xbf16, #tpu.memory_space<vmem>>, vector<1x4x384xbf16>
    %21 = vector.shape_cast %20 : vector<1x4x384xbf16> to vector<4x384xbf16>
    %c24 = arith.constant 24 : index
    %c0_24 = arith.constant 0 : index
    %22 = vector.load %arg5[%c24, %c0_24] : memref<48x384xbf16, #tpu.memory_space<vmem>>, vector<4x384xbf16>
    tpu.vector_store %arg5[%c24, %c0_24], %21 {strides = array<i32>} : memref<48x384xbf16, #tpu.memory_space<vmem>>, vector<4x384xbf16>,
    %c0_25 = arith.constant 0 : index
    %c0_26 = arith.constant 0 : index
    %c37 = arith.constant 37 : index
    %23 = vector.load %arg1[%c0_25, %c0_26, %c37] : memref<1x4x512xbf16, #tpu.memory_space<vmem>>, vector<1x4x384xbf16>
    %24 = vector.shape_cast %23 : vector<1x4x384xbf16> to vector<4x384xbf16>
    %c28 = arith.constant 28 : index
    %c0_27 = arith.constant 0 : index
    %25 = vector.load %arg5[%c28, %c0_27] : memref<48x384xbf16, #tpu.memory_space<vmem>>, vector<4x384xbf16>
    tpu.vector_store %arg5[%c28, %c0_27], %24 {strides = array<i32>} : memref<48x384xbf16, #tpu.memory_space<vmem>>, vector<4x384xbf16>,
    %c0_28 = arith.constant 0 : index
    %c0_29 = arith.constant 0 : index
    %c38 = arith.constant 38 : index
    %26 = vector.load %arg1[%c0_28, %c0_29, %c38] : memref<1x4x512xbf16, #tpu.memory_space<vmem>>, vector<1x4x384xbf16>
    %27 = vector.shape_cast %26 : vector<1x4x384xbf16> to vector<4x384xbf16>
    %c32 = arith.constant 32 : index
    %c0_30 = arith.constant 0 : index
    %28 = vector.load %arg5[%c32, %c0_30] : memref<48x384xbf16, #tpu.memory_space<vmem>>, vector<4x384xbf16>
    tpu.vector_store %arg5[%c32, %c0_30], %27 {strides = array<i32>} : memref<48x384xbf16, #tpu.memory_space<vmem>>, vector<4x384xbf16>,
    %c0_31 = arith.constant 0 : index
    %c0_32 = arith.constant 0 : index
    %29 = vector.load %arg2[%c0_31, %c0_32] : memref<8x48xbf16, #tpu.memory_space<vmem>>, vector<8x48xbf16>
    %c0_33 = arith.constant 0 : index
    %c0_34 = arith.constant 0 : index
    %30 = vector.load %arg5[%c0_33, %c0_34] : memref<48x384xbf16, #tpu.memory_space<vmem>>, vector<48x384xbf16>
    %cst_35 = arith.constant dense<0.000000e+00> : vector<8x384xf32>
    %31 = tpu.matmul %29, %30, %cst_35 {dimension_numbers = #tpu.dot_dimension_numbers<[1], [0], [0], [1], [0, 0, 1, 1], [], []>} : vector<8x48xbf16>, vector<48x384xbf16>, vector<8x384xf32> -> vector<8x384xf32>
    %c0_36 = arith.constant 0 : index
    %c0_37 = arith.constant 0 : index
    %32 = vector.load %arg3[%c0_36, %c0_37] : memref<8x1xf32, #tpu.memory_space<vmem>>, vector<8x1xf32>
    %33 = vector.broadcast %32 : vector<8x1xf32> to vector<8x384xf32>
    %34 = arith.addf %31, %33 : vector<8x384xf32>
    %c0_38 = arith.constant 0 : index
    %c0_39 = arith.constant 0 : index
    %c0_40 = arith.constant 0 : index
    %35 = vector.load %arg4[%c0_38, %c0_39, %c0_40] : memref<1x8x384xf32, #tpu.memory_space<vmem>>, vector<1x8x384xf32>
    %36 = vector.shape_cast %35 : vector<1x8x384xf32> to vector<8x384xf32>
    %37 = vector.shape_cast %34 : vector<8x384xf32> to vector<1x8x384xf32>
    tpu.vector_store %arg4[%c0_38, %c0_39, %c0_40], %37 {strides = array<i32>} : memref<1x8x384xf32, #tpu.memory_space<vmem>>, vector<1x8x384xf32>,
    return
  }
  func.func @transform_0(%arg0: i32) -> (i32, i32, i32) {
    %c0_i32 = arith.constant 0 : i32
    %c0_i32_0 = arith.constant 0 : i32
    %c0_i32_1 = arith.constant 0 : i32
    return %arg0, %c0_i32, %c0_i32_0 : i32, i32, i32
  }
  func.func @transform_1(%arg0: i32) -> (i32, i32) {
    %c0_i32 = arith.constant 0 : i32
    %c0_i32_0 = arith.constant 0 : i32
    %c0_i32_1 = arith.constant 0 : i32
    return %c0_i32, %c0_i32_0 : i32, i32
  }
  func.func @transform_2(%arg0: i32) -> (i32, i32) {
    %c0_i32 = arith.constant 0 : i32
    %c0_i32_0 = arith.constant 0 : i32
    %c0_i32_1 = arith.constant 0 : i32
    return %c0_i32, %c0_i32_0 : i32, i32
  }
  func.func @transform_3(%arg0: i32) -> (i32, i32, i32) {
    %c0_i32 = arith.constant 0 : i32
    %c0_i32_0 = arith.constant 0 : i32
    %c0_i32_1 = arith.constant 0 : i32
    return %arg0, %c0_i32, %c0_i32_0 : i32, i32, i32
  }
}

</mosaic_0001>

<llo_original>
// kernel: conv2d_pallas.1
$region0: #{conv2d_pallas.1}
  #allocation0 [shape = 'u32[]', space=smem, size = 0x4, offset = 0x4, fixed_abs, tag = 'smem constant byte address 0x4 - core index']
  #allocation1 [shape = 'u32[144,128]{1,0:T(1,128)}', space=vmem, size = 0x12000, scoped, tag = 'internal scratch']
  #allocation2 [shape = 'bf16[48,384]{1,0:T(16,128)(2,1)}', space=vmem, size = 0x9000, scoped, tag = 'scratch operand']
  %s0 = inlined_call_operand.vmem [shape: bf16[2,4,512], index: 0, kind: input, shape index: {}]
  %s1 = inlined_call_operand.vmem [shape: bf16[8,48], index: 1, kind: input, shape index: {}]
  %s2 = inlined_call_operand.vmem [shape: f32[8,1], index: 2, kind: input, shape index: {}]
  %s3 = inlined_call_operand.vmem [shape: f32[2,8,384], index: 3, kind: output, shape index: {}]
  %s4 = sld [smem:[#allocation0]]
  $region45: #{conv2d_pallas.1} parent=0
    _
  %s6 = ssub.s32 1, %s4
  %s7 = scalar_select 0, %s6, %s4
  loop: start=0, step=1, limit=4
  $region2: #{conv2d_pallas.1} parent=0 // loop_pre_header
    _
  $region3: #{conv2d_pallas.1} parent=0 // loop_header
    %s9 = sphi 0, %s13
    %p10 = scmp.ge.s32.totalorder %s9, 4
    %s19 = sphi 0, %s21
    %s22 = sphi 0, %s19
    %s23 = sphi 0, %s22
    %s39 = sphi 0, %s23
    %s43 = sphi 0, %s43
    %s45 = sphi 0, %s43
    %s46 = sphi 0, %s45
    %s60 = sphi 0, %s46
    %s64 = sphi 0, %s64
    %s66 = sphi 0, %s64
    %s67 = sphi 0, %s66
    %s81 = sphi 0, %s67
    %s87 = sphi 0, %s89
    %s90 = sphi 0, %s87
    %s91 = sphi 0, %s90
    %s107 = sphi 0, %s91
  $region4: #{conv2d_pallas.1} parent=0 // loop_header_branch
    %12 = sbr.rel (%p10) target = $region8
  $region5: #{conv2d_pallas.1} parent=0 // loop_body
    %s14 = ssub.s32 %s9, 1
    %s15 = ssub.s32 %s9, 2
    %s16 = sadd.s32 %s9, 1
    %s17 = ssub.s32 %s9, %s16
    %p18 = scmp.eq.s32.totalorder %s17, 0
    %s20 = sadd.s32 %s19, 1
    %s21 = scalar_select %p18, %s19, %s20
    %p24 = pneg %p18
    %p25 = scmp.eq.s32.totalorder %s9, 1
    %p26 = por %p24, %p25
    %p27 = scmp.ne.s32.totalorder %s19, %s22
    %p28 = scmp.eq.s32.totalorder %s9, 0
    %p29 = por %p27, %p28
    %p30 = scmp.ne.s32.totalorder %s19, %s22
    %p31 = scmp.eq.s32.totalorder %s14, 1
    %p32 = por %p30, %p31
    %p33 = scmp.ne.s32.totalorder %s22, %s23
    %p34 = scmp.eq.s32.totalorder %s14, 0
    %p35 = por %p33, %p34
    %p36 = scmp.ne.s32.totalorder %s22, %s23
    %p37 = scmp.eq.s32.totalorder %s15, 1
    %p38 = por %p36, %p37
    %p40 = scmp.ne.s32.totalorder %s23, %s39
    %p41 = scmp.eq.s32.totalorder %s15, 0
    %p42 = por %p40, %p41
    %s44 = sadd.s32 %s43, 1
    %p47 = scmp.eq.s32.totalorder %s9, 1
    %p48 = scmp.ne.s32.totalorder %s43, %s45
    %p49 = scmp.eq.s32.totalorder %s9, 0
    %p50 = por %p48, %p49
    %p51 = scmp.ne.s32.totalorder %s43, %s45
    %p52 = scmp.eq.s32.totalorder %s14, 1
    %p53 = por %p51, %p52
    %p54 = scmp.ne.s32.totalorder %s45, %s46
    %p55 = scmp.eq.s32.totalorder %s14, 0
    %p56 = por %p54, %p55
    %p57 = scmp.ne.s32.totalorder %s45, %s46
    %p58 = scmp.eq.s32.totalorder %s15, 1
    %p59 = por %p57, %p58
    %p61 = scmp.ne.s32.totalorder %s46, %s60
    %p62 = scmp.eq.s32.totalorder %s15, 0
    %p63 = por %p61, %p62
    %s65 = sadd.s32 %s64, 1
    %p68 = scmp.eq.s32.totalorder %s9, 1
    %p69 = scmp.ne.s32.totalorder %s64, %s66
    %p70 = scmp.eq.s32.totalorder %s9, 0
    %p71 = por %p69, %p70
    %p72 = scmp.ne.s32.totalorder %s64, %s66
    %p73 = scmp.eq.s32.totalorder %s14, 1
    %p74 = por %p72, %p73
    %p75 = scmp.ne.s32.totalorder %s66, %s67
    %p76 = scmp.eq.s32.totalorder %s14, 0
    %p77 = por %p75, %p76
    %p78 = scmp.ne.s32.totalorder %s66, %s67
    %p79 = scmp.eq.s32.totalorder %s15, 1
    %p80 = por %p78, %p79
    %p82 = scmp.ne.s32.totalorder %s67, %s81
    %p83 = scmp.eq.s32.totalorder %s15, 0
    %p84 = por %p82, %p83
    %s85 = ssub.s32 %s9, %s16
    %p86 = scmp.eq.s32.totalorder %s85, 0
    %s88 = sadd.s32 %s87, 1
    %s89 = scalar_select %p86, %s87, %s88
    %p92 = pneg %p86
    %p93 = scmp.eq.s32.totalorder %s9, 1
    %p94 = por %p92, %p93
    %p95 = scmp.ne.s32.totalorder %s87, %s90
    %p96 = scmp.eq.s32.totalorder %s9, 0
    %p97 = por %p95, %p96
    %p98 = scmp.ne.s32.totalorder %s87, %s90
    %p99 = scmp.eq.s32.totalorder %s14, 1
    %p100 = por %p98, %p99
    %p101 = scmp.ne.s32.totalorder %s90, %s91
    %p102 = scmp.eq.s32.totalorder %s14, 0
    %p103 = por %p101, %p102
    %p104 = scmp.ne.s32.totalorder %s90, %s91
    %p105 = scmp.eq.s32.totalorder %s15, 1
    %p106 = por %p104, %p105
    %p108 = scmp.ne.s32.totalorder %s91, %s107
    %p109 = scmp.eq.s32.totalorder %s15, 0
    %p110 = por %p108, %p109
    %p111 = scmp.le.s32.totalorder 1, %s9
    %p112 = scmp.lt.s32.totalorder %s9, 3
    %p113 = pnand %p111, %p112
    %p114 = pneg %p113
    // Predicated region
    $region9: #{conv2d_pallas.1} parent=5 // pred_check
      _
    $region10: #{conv2d_pallas.1} parent=5 // pred_check_branch
      %116 = sbr.rel (%p113) target = $region12
    $region11: #{conv2d_pallas.1} parent=5 // pred_region
      %s117 = ssub.s32 %s9, 1
      // Predicated region
      $region13: #{conv2d_pallas.1} parent=11 // pred_check
        %p118 = pneg %p56
      $region14: #{conv2d_pallas.1} parent=11 // pred_check_branch
        %120 = sbr.rel (%p118) target = $region16
      $region15: #{conv2d_pallas.1} parent=11 // pred_region
        _
      $region16: #{conv2d_pallas.1} parent=11 // pred_fallthru
        _
      // Predicated region
      $region17: #{conv2d_pallas.1} parent=11 // pred_check
        %p121 = pneg %p77
      $region18: #{conv2d_pallas.1} parent=11 // pred_check_branch
        %123 = sbr.rel (%p121) target = $region20
      $region19: #{conv2d_pallas.1} parent=11 // pred_region
        _
      $region20: #{conv2d_pallas.1} parent=11 // pred_fallthru
        _
    $region12: #{conv2d_pallas.1} parent=5 // pred_fallthru
      _
    %p124 = scmp.lt.s32.totalorder %s9, 2
    // Predicated region
    $region21: #{conv2d_pallas.1} parent=5 // pred_check
      %p125 = pneg %p124
    $region22: #{conv2d_pallas.1} parent=5 // pred_check_branch
      %127 = sbr.rel (%p125) target = $region24
    $region23: #{conv2d_pallas.1} parent=5 // pred_region
      // Predicated region
      $region25: #{conv2d_pallas.1} parent=23 // pred_check
        %p128 = pneg %p29
      $region26: #{conv2d_pallas.1} parent=23 // pred_check_branch
        %130 = sbr.rel (%p128) target = $region28
      $region27: #{conv2d_pallas.1} parent=23 // pred_region
        %p131 = scmp.lt.s32.totalorder %s9, 1
        %s132 = scalar_select %p131, %s9, 1
        %s133 = smul.addr %s132, 4
        %s134 = smul.addr %s133, 2
        %s135 = scalar_lea.vmem %s0, %s134
      $region28: #{conv2d_pallas.1} parent=23 // pred_fallthru
        _
    $region24: #{conv2d_pallas.1} parent=5 // pred_fallthru
      _
    %p136 = scmp.le.s32.totalorder 1, %s9
    %p137 = scmp.lt.s32.totalorder %s9, 3
    %p138 = pnand %p136, %p137
    %p139 = pneg %p138
    // Predicated region
    $region29: #{conv2d_pallas.1} parent=5 // pred_check
      _
    $region30: #{conv2d_pallas.1} parent=5 // pred_check_branch
      %141 = sbr.rel (%p138) target = $region32
    $region31: #{conv2d_pallas.1} parent=5 // pred_region
      %s142 = ssub.s32 %s9, 1
      %p143 = scmp.lt.s32.totalorder %s14, 1
      %s144 = scalar_select %p143, %s14, 1
      %s145 = smul.addr %s144, 4
      %s146 = smul.addr %s145, 2
      %s147 = scalar_lea.vmem %s0, %s146
      %p148 = pneg %p35
      %p149 = pneg %p32
      %p150 = pneg %p56
      %p151 = pneg %p53
      %p152 = pneg %p77
      %p153 = pneg %p74
      %p154 = pneg %p103
      %p155 = pneg %p100
      %p156 = scmp.lt.s32.totalorder %s14, 1
      %s157 = scalar_select %p156, %s14, 1
      %s158 = smul.addr %s157, 3
      %s159 = smul.addr %s158, 8
      %s160 = scalar_lea.vmem %s3, %s159
      %p161 = scmp.lt.s32.totalorder %s14, 1
      %s162 = scalar_select %p161, %s14, 1
      %s163 = smul.addr %s162, 4
      %s164 = smul.addr %s163, 2
      %s165 = scalar_lea.vmem %s0, %s164
      %p166 = scmp.lt.s32.totalorder %s14, 1
      %s167 = scalar_select %p166, %s14, 1
      %s168 = smul.addr %s167, 3
      %s169 = smul.addr %s168, 8
      %s170 = scalar_lea.vmem %s3, %s169
      %172 = vst [vmem:[#allocation2 + $0x30] sm:$0xfc] 0
      %173 = vst [vmem:[#allocation2 + $0x38] sm:$0xfc] 0
      %174 = vst [vmem:[#allocation2 + $0x40] sm:$0xfc] 0
      %v175 = vld [vmem:[%s165] sm:$0x3f]
      %v177 = vcombine.high %v175, %v175
      %v179 = vunpack.c.l.s4 1983009808
      %v180 = vunpack.c.0.s8 %v179
      %v181 = vlaneseq
      %v182 = vshrl.u32 %v181, 7
      %v183 = vsub.s32 %v180, %v182
      %v184 = vrot.slane %v175, %v183
      %v186 = vunpack.c.l.s4 1983009808
      %v187 = vunpack.c.0.s8 %v186
      %v188 = vlaneseq
      %v189 = vshrl.u32 %v188, 7
      %v190 = vsub.s32 %v187, %v189
      %v191 = vrot.slane %v177, %v190
      %v192 = vcombine.high %v184, %v184
      %196 = vst [vmem:[#allocation2] sm:$0x3] %v184
      %197 = vst [vmem:[#allocation2 + $0x8] sm:$0x3] %v192
      %198 = vst [vmem:[#allocation2 + $0x10] sm:$0x3] %v191
      %v199 = vld [vmem:[%s165] sm:$0xff]
      %v201 = vcombine.low %v199, %v199
      %v203 = vunpack.c.l.s4 1983009808
      %v204 = vunpack.c.0.s8 %v203
      %v205 = vlaneseq
      %v206 = vshrl.u32 %v205, 7
      %v207 = vsub.s32 %v204, %v206
      %v208 = vrot.slane %v201, %v207
      %v210 = vunpack.c.l.s4 1983009808
      %v211 = vunpack.c.0.s8 %v210
      %v212 = vlaneseq
      %v213 = vshrl.u32 %v212, 7
      %v214 = vsub.s32 %v211, %v213
      %v215 = vrot.slane %v199, %v214
      %v216 = vcombine.high %v208, %v208
      %v217 = vcombine.high %v215, %v215
      %218 = vrot.lane.b32.xlu0 %v208, 127
      %v219 = vpop.permute.xlu0 %218
      %220 = vrot.lane.b32.xlu0 %v216, 127
      %v221 = vpop.permute.xlu0 %220
      %222 = vrot.lane.b32.xlu0 %v215, 127
      %v223 = vpop.permute.xlu0 %222
      %224 = vrot.lane.b32.xlu0 %v217, 127
      %v225 = vpop.permute.xlu0 %224
      %vm226 = vcmask 1039360
      %v227 = vsel %vm226, %v219, %v221
      %v228 = vsel %vm226, %v221, %v223
      %v229 = vsel %vm226, %v223, %v225
      %233 = vst [vmem:[#allocation2] sm:$0xc] %v227
      %234 = vst [vmem:[#allocation2 + $0x8] sm:$0xc] %v228
      %235 = vst [vmem:[#allocation2 + $0x10] sm:$0xc] %v229
      %v236 = vld [vmem:[%s165] sm:$0xff]
      %v238 = vcombine.high %v236, %v236
      %v240 = vunpack.c.l.s4 1983009808
      %v241 = vunpack.c.0.s8 %v240
      %v242 = vlaneseq
      %v243 = vshrl.u32 %v242, 7
      %v244 = vsub.s32 %v241, %v243
      %v245 = vrot.slane %v236, %v244
      %v247 = vunpack.c.l.s4 1983009808
      %v248 = vunpack.c.0.s8 %v247
      %v249 = vlaneseq
      %v250 = vshrl.u32 %v249, 7
      %v251 = vsub.s32 %v248, %v250
      %v252 = vrot.slane %v238, %v251
      %v253 = vcombine.low %v245, %v245
      %v254 = vcombine.low %v252, %v252
      %255 = vrot.lane.b32.xlu0 %v253, 126
      %v256 = vpop.permute.xlu0 %255
      %257 = vrot.lane.b32.xlu0 %v245, 126
      %v258 = vpop.permute.xlu0 %257
      %259 = vrot.lane.b32.xlu0 %v254, 126
      %v260 = vpop.permute.xlu0 %259
      %261 = vrot.lane.b32.xlu0 %v252, 126
      %v262 = vpop.permute.xlu0 %261
      %vm263 = vcmask 1031168
      %v264 = vsel %vm263, %v256, %v258
      %v265 = vsel %vm263, %v258, %v260
      %v266 = vsel %vm263, %v260, %v262
      %270 = vst [vmem:[#allocation2] sm:$0x30] %v264
      %271 = vst [vmem:[#allocation2 + $0x8] sm:$0x30] %v265
      %272 = vst [vmem:[#allocation2 + $0x10] sm:$0x30] %v266
      %v273 = vld [vmem:[%s165] sm:$0xff]
      %v275 = vcombine.low %v273, %v273
      %v277 = vunpack.c.l.s4 1983009808
      %v278 = vunpack.c.0.s8 %v277
      %v279 = vlaneseq
      %v280 = vshrl.u32 %v279, 7
      %v281 = vsub.s32 %v278, %v280
      %v282 = vrot.slane %v275, %v281
      %v284 = vunpack.c.l.s4 1983009808
      %v285 = vunpack.c.0.s8 %v284
      %v286 = vlaneseq
      %v287 = vshrl.u32 %v286, 7
      %v288 = vsub.s32 %v285, %v287
      %v289 = vrot.slane %v273, %v288
      %v290 = vcombine.low %v282, %v282
      %v291 = vcombine.low %v289, %v289
      %292 = vrot.lane.b32.xlu0 %v290, 110
      %v293 = vpop.permute.xlu0 %292
      %294 = vrot.lane.b32.xlu0 %v282, 110
      %v295 = vpop.permute.xlu0 %294
      %296 = vrot.lane.b32.xlu0 %v291, 110
      %v297 = vpop.permute.xlu0 %296
      %298 = vrot.lane.b32.xlu0 %v289, 110
      %v299 = vpop.permute.xlu0 %298
      %vm300 = vcmask 900096
      %v301 = vsel %vm300, %v293, %v295
      %v302 = vsel %vm300, %v295, %v297
      %v303 = vsel %vm300, %v297, %v299
      %307 = vst [vmem:[#allocation2] sm:$0xc0] %v301
      %308 = vst [vmem:[#allocation2 + $0x8] sm:$0xc0] %v302
      %309 = vst [vmem:[#allocation2 + $0x10] sm:$0xc0] %v303
      %v310 = vld [vmem:[%s165] sm:$0xff]
      %v312 = vcombine.high %v310, %v310
      %v314 = vunpack.c.l.s4 1983009808
      %v315 = vunpack.c.0.s8 %v314
      %v316 = vlaneseq
      %v317 = vshrl.u32 %v316, 7
      %v318 = vsub.s32 %v315, %v317
      %v319 = vrot.slane %v310, %v318
      %v321 = vunpack.c.l.s4 1983009808
      %v322 = vunpack.c.0.s8 %v321
      %v323 = vlaneseq
      %v324 = vshrl.u32 %v323, 7
      %v325 = vsub.s32 %v322, %v324
      %v326 = vrot.slane %v312, %v325
      %v327 = vcombine.high %v319, %v319
      %v328 = vcombine.high %v326, %v326
      %329 = vrot.lane.b32.xlu0 %v319, 109
      %v330 = vpop.permute.xlu0 %329
      %331 = vrot.lane.b32.xlu0 %v327, 109
      %v332 = vpop.permute.xlu0 %331
      %333 = vrot.lane.b32.xlu0 %v326, 109
      %v334 = vpop.permute.xlu0 %333
      %335 = vrot.lane.b32.xlu0 %v328, 109
      %v336 = vpop.permute.xlu0 %335
      %vm337 = vcmask 891904
      %v338 = vsel %vm337, %v330, %v332
      %v339 = vsel %vm337, %v332, %v334
      %v340 = vsel %vm337, %v334, %v336
      %344 = vst [vmem:[#allocation2 + $0x18] sm:$0x3] %v338
      %345 = vst [vmem:[#allocation2 + $0x20] sm:$0x3] %v339
      %346 = vst [vmem:[#allocation2 + $0x28] sm:$0x3] %v340
      %v347 = vld [vmem:[%s165] sm:$0xff]
      %v349 = vcombine.low %v347, %v347
      %v351 = vunpack.c.l.s4 1983009808
      %v352 = vunpack.c.0.s8 %v351
      %v353 = vlaneseq
      %v354 = vshrl.u32 %v353, 7
      %v355 = vsub.s32 %v352, %v354
      %v356 = vrot.slane %v349, %v355
      %v358 = vunpack.c.l.s4 1983009808
      %v359 = vunpack.c.0.s8 %v358
      %v360 = vlaneseq
      %v361 = vshrl.u32 %v360, 7
      %v362 = vsub.s32 %v359, %v361
      %v363 = vrot.slane %v347, %v362
      %v364 = vcombine.high %v356, %v356
      %v365 = vcombine.high %v363, %v363
      %366 = vrot.lane.b32.xlu0 %v356, 108
      %v367 = vpop.permute.xlu0 %366
      %368 = vrot.lane.b32.xlu0 %v364, 108
      %v369 = vpop.permute.xlu0 %368
      %370 = vrot.lane.b32.xlu0 %v363, 108
      %v371 = vpop.permute.xlu0 %370
      %372 = vrot.lane.b32.xlu0 %v365, 108
      %v373 = vpop.permute.xlu0 %372
      %vm374 = vcmask 883712
      %v375 = vsel %vm374, %v367, %v369
      %v376 = vsel %vm374, %v369, %v371
      %v377 = vsel %vm374, %v371, %v373
      %381 = vst [vmem:[#allocation2 + $0x18] sm:$0xc] %v375
      %382 = vst [vmem:[#allocation2 + $0x20] sm:$0xc] %v376
      %383 = vst [vmem:[#allocation2 + $0x28] sm:$0xc] %v377
      %v384 = vld [vmem:[%s165] sm:$0xff]
      %v386 = vcombine.high %v384, %v384
      %v388 = vunpack.c.l.s4 1983009808
      %v389 = vunpack.c.0.s8 %v388
      %v390 = vlaneseq
      %v391 = vshrl.u32 %v390, 7
      %v392 = vsub.s32 %v389, %v391
      %v393 = vrot.slane %v384, %v392
      %v395 = vunpack.c.l.s4 1983009808
      %v396 = vunpack.c.0.s8 %v395
      %v397 = vlaneseq
      %v398 = vshrl.u32 %v397, 7
      %v399 = vsub.s32 %v396, %v398
      %v400 = vrot.slane %v386, %v399
      %v401 = vcombine.low %v393, %v393
      %v402 = vcombine.low %v400, %v400
      %403 = vrot.lane.b32.xlu0 %v401, 92
      %v404 = vpop.permute.xlu0 %403
      %405 = vrot.lane.b32.xlu0 %v393, 92
      %v406 = vpop.permute.xlu0 %405
      %407 = vrot.lane.b32.xlu0 %v402, 92
      %v408 = vpop.permute.xlu0 %407
      %409 = vrot.lane.b32.xlu0 %v400, 92
      %v410 = vpop.permute.xlu0 %409
      %vm411 = vcmask 752640
      %v412 = vsel %vm411, %v404, %v406
      %v413 = vsel %vm411, %v406, %v408
      %v414 = vsel %vm411, %v408, %v410
      %418 = vst [vmem:[#allocation2 + $0x18] sm:$0x30] %v412
      %419 = vst [vmem:[#allocation2 + $0x20] sm:$0x30] %v413
      %420 = vst [vmem:[#allocation2 + $0x28] sm:$0x30] %v414
      %v421 = vld [vmem:[%s165] sm:$0xff]
      %v423 = vcombine.low %v421, %v421
      %v425 = vunpack.c.l.s4 1983009808
      %v426 = vunpack.c.0.s8 %v425
      %v427 = vlaneseq
      %v428 = vshrl.u32 %v427, 7
      %v429 = vsub.s32 %v426, %v428
      %v430 = vrot.slane %v423, %v429
      %v432 = vunpack.c.l.s4 1983009808
      %v433 = vunpack.c.0.s8 %v432
      %v434 = vlaneseq
      %v435 = vshrl.u32 %v434, 7
      %v436 = vsub.s32 %v433, %v435
      %v437 = vrot.slane %v421, %v436
      %v438 = vcombine.low %v430, %v430
      %v439 = vcombine.low %v437, %v437
      %440 = vrot.lane.b32.xlu0 %v438, 91
      %v441 = vpop.permute.xlu0 %440
      %442 = vrot.lane.b32.xlu0 %v430, 91
      %v443 = vpop.permute.xlu0 %442
      %444 = vrot.lane.b32.xlu0 %v439, 91
      %v445 = vpop.permute.xlu0 %444
      %446 = vrot.lane.b32.xlu0 %v437, 91
      %v447 = vpop.permute.xlu0 %446
      %vm448 = vcmask 744448
      %v449 = vsel %vm448, %v441, %v443
      %v450 = vsel %vm448, %v443, %v445
      %v451 = vsel %vm448, %v445, %v447
      %455 = vst [vmem:[#allocation2 + $0x18] sm:$0xc0] %v449
      %456 = vst [vmem:[#allocation2 + $0x20] sm:$0xc0] %v450
      %457 = vst [vmem:[#allocation2 + $0x28] sm:$0xc0] %v451
      %v458 = vld [vmem:[%s165] sm:$0xff]
      %v460 = vcombine.high %v458, %v458
      %v462 = vunpack.c.l.s4 1983009808
      %v463 = vunpack.c.0.s8 %v462
      %v464 = vlaneseq
      %v465 = vshrl.u32 %v464, 7
      %v466 = vsub.s32 %v463, %v465
      %v467 = vrot.slane %v458, %v466
      %v469 = vunpack.c.l.s4 1983009808
      %v470 = vunpack.c.0.s8 %v469
      %v471 = vlaneseq
      %v472 = vshrl.u32 %v471, 7
      %v473 = vsub.s32 %v470, %v472
      %v474 = vrot.slane %v460, %v473
      %v475 = vcombine.high %v467, %v467
      %v476 = vcombine.high %v474, %v474
      %477 = vrot.lane.b32.xlu0 %v467, 90
      %v478 = vpop.permute.xlu0 %477
      %479 = vrot.lane.b32.xlu0 %v475, 90
      %v480 = vpop.permute.xlu0 %479
      %481 = vrot.lane.b32.xlu0 %v474, 90
      %v482 = vpop.permute.xlu0 %481
      %483 = vrot.lane.b32.xlu0 %v476, 90
      %v484 = vpop.permute.xlu0 %483
      %vm485 = vcmask 736256
      %v486 = vsel %vm485, %v478, %v480
      %v487 = vsel %vm485, %v480, %v482
      %v488 = vsel %vm485, %v482, %v484
      %492 = vst [vmem:[#allocation2 + $0x30] sm:$0x3] %v486
      %493 = vst [vmem:[#allocation2 + $0x38] sm:$0x3] %v487
      %494 = vst [vmem:[#allocation2 + $0x40] sm:$0x3] %v488
      %v495 = vld [vmem:[%s1] sm:$0xf]
      %v496 = vld [vmem:[#allocation2] sm:$0xff]
      %v497 = vld [vmem:[#allocation2 + $0x8] sm:$0xff]
      %v498 = vld [vmem:[#allocation2 + $0x10] sm:$0xff]
      %v499 = vld [vmem:[#allocation2 + $0x18] sm:$0xff]
      %v500 = vld [vmem:[#allocation2 + $0x20] sm:$0xff]
      %v501 = vld [vmem:[#allocation2 + $0x28] sm:$0xff]
      %v502 = vld [vmem:[#allocation2 + $0x30] sm:$0xff]
      %v503 = vld [vmem:[#allocation2 + $0x38] sm:$0xff]
      %v504 = vld [vmem:[#allocation2 + $0x40] sm:$0xff]
      %v505 = vld [vmem:[%s2] sm:$0xff]
      %507 = vset.pattern.permute.xlu0 0
      %508 = vperm.xlu0 %507, %v505
      %v509 = vpop.permute.xlu0 %508
      %vm511 = vcmask 392192
      %v513 = vsel %vm511, %v495, 0
      %515 = vmatprep.subr.bf16.mxu0 %v497
      %516 = vmatpush1.bf16.msra.mxu0 %v496
      %517 = vmatprep.subr.bf16.mxu0 %v500
      %518 = vmatpush1.bf16.msra.mxu0 %v499
      %519 = vmatprep.subr.bf16.mxu0 %v503
      %520 = vmatpush1.bf16.msra.mxu0 %v502
      %521 = vmatprep.subr.bf16.mxu0 0
      %522 = vmatpush1.bf16.msra.mxu0 0
      %523 = vmatprep.subr.bf16.mxu0 0
      %524 = vmatpush1.bf16.msra.mxu0 0
      %525 = vmatprep.subr.bf16.mxu0 0
      %526 = vmatpush1.bf16.msra.mxu0 0
      %527 = vmatprep.subr.bf16.mxu0 0
      %528 = vmatpush1.bf16.msra.mxu0 0
      %529 = vmatprep.subr.bf16.mxu0 0
      %530 = vmatpush1.bf16.msra.mxu0 0
      %531 = vmatprep.subr.bf16.mxu0 0
      %532 = vmatpush1.bf16.msra.mxu0 0
      %533 = vmatprep.subr.bf16.mxu0 0
      %534 = vmatpush1.bf16.msra.mxu0 0
      %535 = vmatprep.subr.bf16.mxu0 0
      %536 = vmatpush1.bf16.msra.mxu0 0
      %537 = vmatprep.subr.bf16.mxu0 0
      %538 = vmatpush1.bf16.msra.mxu0 0
      %539 = vmatprep.subr.bf16.mxu0 0
      %540 = vmatpush1.bf16.msra.mxu0 0
      %541 = vmatprep.subr.bf16.mxu0 0
      %542 = vmatpush1.bf16.msra.mxu0 0
      %543 = vmatprep.subr.bf16.mxu0 0
      %544 = vmatpush1.bf16.msra.mxu0 0
      %545 = vmatprep.subr.bf16.mxu0 0
      %546 = vmatpush1.bf16.msra.mxu0 0
      %547 = vmatprep.mubr.bf16.mxu0 0
      %548 = vmatmul.mubr.bf16.gmra.mrb[0].mxu0 %v513
      %v549 = vpop.f32.mrb[0].mxu0
      %v550 = vadd.f32 %v509, %v549
      %v551 = vpop.f32.mrb[0].mxu0
      %v552 = vadd.f32 %v509, %v551
      %v553 = vpop.f32.mrb[0].mxu0
      %v554 = vpop.f32.mrb[0].mxu0
      %555 = vdwg.mxu0
      %556 = vmatprep.subr.bf16.mxu0 0
      %557 = vmatpush1.bf16.msra.mxu0 %v498
      %558 = vmatprep.subr.bf16.mxu0 0
      %559 = vmatpush1.bf16.msra.mxu0 %v501
      %560 = vmatprep.subr.bf16.mxu0 0
      %561 = vmatpush1.bf16.msra.mxu0 %v504
      %562 = vmatprep.subr.bf16.mxu0 0
      %563 = vmatpush1.bf16.msra.mxu0 0
      %564 = vmatprep.subr.bf16.mxu0 0
      %565 = vmatpush1.bf16.msra.mxu0 0
      %566 = vmatprep.subr.bf16.mxu0 0
      %567 = vmatpush1.bf16.msra.mxu0 0
      %568 = vmatprep.subr.bf16.mxu0 0
      %569 = vmatpush1.bf16.msra.mxu0 0
      %570 = vmatprep.subr.bf16.mxu0 0
      %571 = vmatpush1.bf16.msra.mxu0 0
      %572 = vmatprep.subr.bf16.mxu0 0
      %573 = vmatpush1.bf16.msra.mxu0 0
      %574 = vmatprep.subr.bf16.mxu0 0
      %575 = vmatpush1.bf16.msra.mxu0 0
      %576 = vmatprep.subr.bf16.mxu0 0
      %577 = vmatpush1.bf16.msra.mxu0 0
      %578 = vmatprep.subr.bf16.mxu0 0
      %579 = vmatpush1.bf16.msra.mxu0 0
      %580 = vmatprep.subr.bf16.mxu0 0
      %581 = vmatpush1.bf16.msra.mxu0 0
      %582 = vmatprep.subr.bf16.mxu0 0
      %583 = vmatpush1.bf16.msra.mxu0 0
      %584 = vmatprep.subr.bf16.mxu0 0
      %585 = vmatpush1.bf16.msra.mxu0 0
      %586 = vmatprep.subr.bf16.mxu0 0
      %587 = vmatpush1.bf16.msra.mxu0 0
      %588 = vmatprep.mubr.bf16.mxu0 0
      %589 = vmatmul.mubr.bf16.gmra.mrb[0].mxu0 %v513
      %v590 = vpop.f32.mrb[0].mxu0
      %v591 = vadd.f32 %v509, %v590
      %v592 = vpop.f32.mrb[0].mxu0
      %v593 = vpop.f32.mrb[0].mxu0
      %v594 = vpop.f32.mrb[0].mxu0
      %595 = vdwg.mxu0
      %596 = vst [vmem:[%s170] sm:$0xff] %v550
      %597 = vst [vmem:[%s170 + $0x8] sm:$0xff] %v552
      %598 = vst [vmem:[%s170 + $0x10] sm:$0xff] %v591
      %p599 = scmp.lt.s32.totalorder %s14, 1
      %s600 = scalar_select %p599, %s14, 1
      %s601 = smul.addr %s600, 3
      %s602 = smul.addr %s601, 8
      %s603 = scalar_lea.vmem %s3, %s602
      // Predicated region
      $region33: #{conv2d_pallas.1} parent=31 // pred_check
        %p604 = pneg %p100
      $region34: #{conv2d_pallas.1} parent=31 // pred_check_branch
        %606 = sbr.rel (%p604) target = $region36
      $region35: #{conv2d_pallas.1} parent=31 // pred_region
        _
      $region36: #{conv2d_pallas.1} parent=31 // pred_fallthru
        _
    $region32: #{conv2d_pallas.1} parent=5 // pred_fallthru
      _
    %p607 = scmp.le.s32.totalorder 2, %s9
    // Predicated region
    $region37: #{conv2d_pallas.1} parent=5 // pred_check
      %p608 = pneg %p607
    $region38: #{conv2d_pallas.1} parent=5 // pred_check_branch
      %610 = sbr.rel (%p608) target = $region40
    $region39: #{conv2d_pallas.1} parent=5 // pred_region
      %s611 = ssub.s32 %s9, 2
      // Predicated region
      $region41: #{conv2d_pallas.1} parent=39 // pred_check
        %p612 = pneg %p106
      $region42: #{conv2d_pallas.1} parent=39 // pred_check_branch
        %614 = sbr.rel (%p612) target = $region44
      $region43: #{conv2d_pallas.1} parent=39 // pred_region
        %p615 = scmp.lt.s32.totalorder %s15, 1
        %s616 = scalar_select %p615, %s15, 1
        %s617 = smul.addr %s616, 3
        %s618 = smul.addr %s617, 8
        %s619 = scalar_lea.vmem %s3, %s618
      $region44: #{conv2d_pallas.1} parent=39 // pred_fallthru
        _
    $region40: #{conv2d_pallas.1} parent=5 // pred_fallthru
      _
  $region6: #{conv2d_pallas.1} parent=0 // loop_footer
    %s13 = sadd.s32 1, %s9
  $region7: #{conv2d_pallas.1} parent=0 // loop_footer_branch
    %8 = sbr.rel target = $region3
  $region8: #{conv2d_pallas.1} parent=0 // loop_exit
    _

</llo_original>
